<compile_context>
chip_gen: v6e
topology: v6e:2x2x1
jax: 0.10.0
libtpu: 0.0.40
codegen_flags: <defaults>
</compile_context>

<pallas_src>
import jax
import jax.numpy as jnp
from jax.experimental import pallas as pl
from jax.experimental.pallas import tpu as pltpu


H3, H3P = 64, 128    # hidden3 width, lane-padded width
C, CP = 10, 128      # num classes, lane-padded width


def _round_up(n, m):
    return ((n + m - 1) // m) * m


def _choose_batch_tile(B, tb_max=512):
    """Pick (tile, padded_batch).

    Tiles are multiples of 8 (sublane alignment). Goals (per perf review):
    big tiles for DMA efficiency, >= 2 grid steps when possible (v7x megacore),
    and minimal padded-row waste.
    """
    B8 = _round_up(B, 8)
    if B8 <= tb_max:
        if B8 >= 16:
            # Split into exactly 2 tiles so both v7x TensorCores get work.
            tile = _round_up((B8 + 1) // 2, 8)
        else:
            tile = B8
        return tile, _round_up(B, tile)
    # Large batch: pick from {tb_max, /2, /4, /8} minimizing padding waste,
    # preferring the larger tile on ties (fewer per-step pipeline overheads).
    best = None
    t = tb_max
    for _ in range(4):
        b_pad = _round_up(B, t)
        key = (b_pad - B, -t)
        if best is None or key < best[0]:
            best = (key, t, b_pad)
        t = max(t // 2, 8)
    return best[1], best[2]


def mlp_kernel(x_ref,
               w1_ref, b1_ref,
               w2_ref, b2_ref,
               w3_ref, b3_ref,
               w4_ref, b4_ref,
               o_ref):
    # x arrives as f32 straight from HBM; cast to bf16 in-kernel (VALU pack,
    # hidden under the x DMA). Note for v5e: these casts land on the VALU
    # (no bf16 VPU path); they are not the binding slot at these sizes.
    x = x_ref[...].astype(jnp.bfloat16)

    # hidden1: 784 -> 256, ReLU (+ dropout as identity)   [bf16 MXU, f32 acc]
    h = jnp.dot(x, w1_ref[...], preferred_element_type=jnp.float32)
    h = jnp.maximum(h + b1_ref[...], 0.0)

    # hidden2: 256 -> 128, ReLU (+ dropout as identity)
    h = jnp.dot(h.astype(jnp.bfloat16), w2_ref[...],
                preferred_element_type=jnp.float32)
    h = jnp.maximum(h + b2_ref[...], 0.0)

    # hidden3: 128 -> 128 (64 real + 64 zero-padded), ReLU (+ dropout as identity)
    h = jnp.dot(h.astype(jnp.bfloat16), w3_ref[...],
                preferred_element_type=jnp.float32)
    h = jnp.maximum(h + b3_ref[...], 0.0)

    # output layer: 128 lanes = 10 real classes + 118 pad lanes (-1e30 bias).
    logits = jnp.dot(h.astype(jnp.bfloat16), w4_ref[...],
                     preferred_element_type=jnp.float32) + b4_ref[...]

    # softmax over all 128 lanes; pad lanes exponentiate to exactly 0 so the
    # normalization over the 10 real classes is unchanged. Exact f32 divide
    # so every row sums to 1 to f32 precision (then cast to the output dtype).
    m = jnp.max(logits, axis=-1, keepdims=True)
    e = jnp.exp(logits - m)
    s = jnp.sum(e, axis=-1, keepdims=True)
    o_ref[...] = (e / s).astype(o_ref.dtype)


def prepare_params(params):
    """One-time parameter prep (hoisted out of the forward, per perf review).

    Returns the tuple (w1,b1,w2,b2,w3p,b3p,w4p,b4p) with bf16 MXU weights,
    f32 biases, hidden3 lane-padded 64 -> 128 (zero weights/bias) and the
    output layer padded 10 -> 128 lanes (zero weight cols, -1e30 pad bias so
    padded logits vanish under softmax). Call once and reuse across calls.
    """
    w1 = params["w1"].astype(jnp.bfloat16)                         # [784, 256]
    b1 = params["b1"].astype(jnp.float32).reshape(1, -1)           # [1, 256]
    w2 = params["w2"].astype(jnp.bfloat16)                         # [256, 128]
    b2 = params["b2"].astype(jnp.float32).reshape(1, -1)           # [1, 128]

    w3 = params["w3"].astype(jnp.float32)                          # [128, 64]
    b3 = params["b3"].astype(jnp.float32).reshape(1, -1)           # [1, 64]
    w3p = (jnp.zeros((w3.shape[0], H3P), jnp.float32)
           .at[:, :H3].set(w3).astype(jnp.bfloat16))               # [128, 128]
    b3p = jnp.zeros((1, H3P), jnp.float32).at[:, :H3].set(b3)      # [1, 128]

    w4 = params["w4"].astype(jnp.float32)                          # [64, 10]
    b4 = params["b4"].astype(jnp.float32).reshape(1, -1)           # [1, 10]
    w4p = (jnp.zeros((H3P, CP), jnp.float32)
           .at[:H3, :C].set(w4).astype(jnp.bfloat16))              # [128, 128]
    b4p = jnp.full((1, CP), -1e30, jnp.float32).at[:, :C].set(b4)  # [1, 128]

    return (w1, b1, w2, b2, w3p, b3p, w4p, b4p)


def classifierv1_forward(x, prepared, *, tb_max=512, out_dtype=jnp.bfloat16):
    """x: [B, 784] float32. prepared: output of prepare_params().
    Returns [B, 10] softmax probabilities (bf16 by default; pass
    out_dtype=jnp.float32 for an f32 result)."""
    B, D = x.shape
    assert D == 784
    w1, b1, w2, b2, w3p, b3p, w4p, b4p = prepared

    tb, B_pad = _choose_batch_tile(B, tb_max)
    xp = x.astype(jnp.float32)
    if B_pad != B:
        # Only pay the pad pass when B isn't tile-aligned.
        xp = jnp.pad(xp, ((0, B_pad - B), (0, 0)))

    def full_spec(a):
        # Full-array block with a constant index_map: fetched once, stays in
        # VMEM across all batch tiles.
        return pl.BlockSpec(a.shape, lambda i: (0,) * a.ndim)

    weight_bytes = sum(int(a.size) * a.dtype.itemsize for a in prepared)
    out_itemsize = jnp.dtype(out_dtype).itemsize
    cost = pl.CostEstimate(
        flops=2 * B_pad * (784 * 256 + 256 * 128 + 128 * 128 + 128 * 128),
        transcendentals=B_pad * CP,
        bytes_accessed=B_pad * 784 * 4 + B_pad * CP * out_itemsize + weight_bytes,
    )

    out = pl.pallas_call(
        mlp_kernel,
        out_shape=jax.ShapeDtypeStruct((B_pad, CP), out_dtype),
        grid_spec=pltpu.PrefetchScalarGridSpec(
            num_scalar_prefetch=0,
            grid=(B_pad // tb,),
            in_specs=[
                pl.BlockSpec((tb, 784), lambda i: (i, 0)),   # x tile (f32)
                full_spec(w1), full_spec(b1),
                full_spec(w2), full_spec(b2),
                full_spec(w3p), full_spec(b3p),
                full_spec(w4p), full_spec(b4p),
            ],
            out_specs=pl.BlockSpec((tb, CP), lambda i: (i, 0)),
        ),
        compiler_params=pltpu.CompilerParams(
            dimension_semantics=("parallel",),
            vmem_limit_bytes=32 * 1024 * 1024,
        ),
        cost_estimate=cost,
    )(xp, w1, b1, w2, b2, w3p, b3p, w4p, b4p)

    return out[:B, :C]


def init_params(key):
    """Deterministic init matching the layer shapes of classifierv1.
    PyTorch nn.Linear(in, out) -> weight [out, in]; we store transposed [in, out]."""
    dims = [(784, 256), (256, 128), (128, 64), (64, 10)]
    params = {}
    keys = jax.random.split(key, 2 * len(dims))
    for idx, (din, dout) in enumerate(dims):
        bound = 1.0 / (din ** 0.5)  # PyTorch default uniform bound
        w = jax.random.uniform(keys[2 * idx], (din, dout),
                               minval=-bound, maxval=bound, dtype=jnp.float32)
        b = jax.random.uniform(keys[2 * idx + 1], (1, dout),
                               minval=-bound, maxval=bound, dtype=jnp.float32)
        params[f"w{idx + 1}"] = w
        params[f"b{idx + 1}"] = b
    return params


def _ref_forward(x, params):
    """Pure-JAX reference emulating the kernel's bf16-input / f32-accum matmuls."""
    def lin(h, w, b):
        hb = h.astype(jnp.bfloat16).astype(jnp.float32)
        wb = w.astype(jnp.bfloat16).astype(jnp.float32)
        return jnp.dot(hb, wb, preferred_element_type=jnp.float32) + b
    h = jnp.maximum(lin(x, params["w1"], params["b1"]), 0.0)
    h = jnp.maximum(lin(h, params["w2"], params["b2"]), 0.0)
    h = jnp.maximum(lin(h, params["w3"], params["b3"]), 0.0)
    logits = lin(h, params["w4"], params["b4"])
    return jax.nn.softmax(logits, axis=-1)


if __name__ == "__main__":
    key = jax.random.PRNGKey(0)
    k_x, k_p = jax.random.split(key)

    B = 8  # small batch for the smoke test (real workloads use 256-512 row tiles)
    x = jax.random.normal(k_x, (B, 784), dtype=jnp.float32)
    params = init_params(k_p)
    prepared = prepare_params(params)   # hoisted one-time prep, reused per call

    out = classifierv1_forward(x, prepared)
    out = jax.block_until_ready(out)

    assert out.shape == (B, 10)
    out_f32 = out.astype(jnp.float32)

    # softmax rows sum to ~1 (exact f32 divide in-kernel; tolerance covers the
    # bf16 output rounding only)
    row_sums = jnp.sum(out_f32, axis=1)
    assert bool(jnp.all(jnp.abs(row_sums - 1.0) < 1e-2))
    assert bool(jnp.all(out_f32 >= 0.0))

    # parity vs. a pure-JAX reference using the same bf16-rounded inputs
    ref = _ref_forward(x, params)
    assert bool(jnp.max(jnp.abs(out_f32 - ref)) < 2e-2)

    print("KERNEL_OK")
</pallas_src>

<mosaic_0001>
module attributes {stable_mosaic.version = 11 : i64} {
  func.func @mlp_kernel(%arg0: i32, %arg1: memref<8x784xf32, #tpu.memory_space<vmem>>, %arg2: memref<784x256xbf16, #tpu.memory_space<vmem>>, %arg3: memref<1x256xf32, #tpu.memory_space<vmem>>, %arg4: memref<256x128xbf16, #tpu.memory_space<vmem>>, %arg5: memref<1x128xf32, #tpu.memory_space<vmem>>, %arg6: memref<128x128xbf16, #tpu.memory_space<vmem>>, %arg7: memref<1x128xf32, #tpu.memory_space<vmem>>, %arg8: memref<128x128xbf16, #tpu.memory_space<vmem>>, %arg9: memref<1x128xf32, #tpu.memory_space<vmem>>, %arg10: memref<8x128xbf16, #tpu.memory_space<vmem>>) attributes {dimension_semantics = [#tpu.dimension_semantics<parallel>], iteration_bounds = array<i64: 1>, scalar_prefetch = 0 : i64, scratch_operands = 0 : i64, tpu.core_type = #tpu.core_type<tc>, window_params = [{transform_indices = @transform_0, window_bounds = array<i64: 8, 784>}, {pipeline_mode = #tpu.pipeline_mode<synchronous>, transform_indices = @transform_1, window_bounds = array<i64: 784, 256>}, {pipeline_mode = #tpu.pipeline_mode<synchronous>, transform_indices = @transform_2, window_bounds = array<i64: 1, 256>}, {pipeline_mode = #tpu.pipeline_mode<synchronous>, transform_indices = @transform_3, window_bounds = array<i64: 256, 128>}, {pipeline_mode = #tpu.pipeline_mode<synchronous>, transform_indices = @transform_4, window_bounds = array<i64: 1, 128>}, {pipeline_mode = #tpu.pipeline_mode<synchronous>, transform_indices = @transform_5, window_bounds = array<i64: 128, 128>}, {pipeline_mode = #tpu.pipeline_mode<synchronous>, transform_indices = @transform_6, window_bounds = array<i64: 1, 128>}, {pipeline_mode = #tpu.pipeline_mode<synchronous>, transform_indices = @transform_7, window_bounds = array<i64: 128, 128>}, {pipeline_mode = #tpu.pipeline_mode<synchronous>, transform_indices = @transform_8, window_bounds = array<i64: 1, 128>}, {transform_indices = @transform_9, window_bounds = array<i64: 8, 128>}]} {
    %c0 = arith.constant 0 : index
    %c0_0 = arith.constant 0 : index
    %0 = vector.load %arg1[%c0, %c0_0] : memref<8x784xf32, #tpu.memory_space<vmem>>, vector<8x784xf32>
    %1 = arith.truncf %0 : vector<8x784xf32> to vector<8x784xbf16>
    %c0_1 = arith.constant 0 : index
    %c0_2 = arith.constant 0 : index
    %2 = vector.load %arg2[%c0_1, %c0_2] : memref<784x256xbf16, #tpu.memory_space<vmem>>, vector<784x256xbf16>
    %cst = arith.constant dense<0.000000e+00> : vector<8x256xf32>
    %3 = tpu.matmul %1, %2, %cst {dimension_numbers = #tpu.dot_dimension_numbers<[1], [0], [0], [1], [0, 0, 1, 1], [], []>} : vector<8x784xbf16>, vector<784x256xbf16>, vector<8x256xf32> -> vector<8x256xf32>
    %c0_3 = arith.constant 0 : index
    %c0_4 = arith.constant 0 : index
    %4 = vector.load %arg3[%c0_3, %c0_4] : memref<1x256xf32, #tpu.memory_space<vmem>>, vector<1x256xf32>
    %5 = vector.broadcast %4 : vector<1x256xf32> to vector<8x256xf32>
    %6 = arith.addf %3, %5 : vector<8x256xf32>
    %cst_5 = arith.constant 0.000000e+00 : f32
    %7 = vector.broadcast %cst_5 : f32 to vector<8x256xf32>
    %8 = arith.maximumf %6, %7 : vector<8x256xf32>
    %9 = arith.truncf %8 : vector<8x256xf32> to vector<8x256xbf16>
    %c0_6 = arith.constant 0 : index
    %c0_7 = arith.constant 0 : index
    %10 = vector.load %arg4[%c0_6, %c0_7] : memref<256x128xbf16, #tpu.memory_space<vmem>>, vector<256x128xbf16>
    %cst_8 = arith.constant dense<0.000000e+00> : vector<8x128xf32>
    %11 = tpu.matmul %9, %10, %cst_8 {dimension_numbers = #tpu.dot_dimension_numbers<[1], [0], [0], [1], [0, 0, 1, 1], [], []>} : vector<8x256xbf16>, vector<256x128xbf16>, vector<8x128xf32> -> vector<8x128xf32>
    %c0_9 = arith.constant 0 : index
    %c0_10 = arith.constant 0 : index
    %12 = vector.load %arg5[%c0_9, %c0_10] : memref<1x128xf32, #tpu.memory_space<vmem>>, vector<1x128xf32>
    %13 = vector.broadcast %12 : vector<1x128xf32> to vector<8x128xf32>
    %14 = arith.addf %11, %13 : vector<8x128xf32>
    %cst_11 = arith.constant 0.000000e+00 : f32
    %15 = vector.broadcast %cst_11 : f32 to vector<8x128xf32>
    %16 = arith.maximumf %14, %15 : vector<8x128xf32>
    %17 = arith.truncf %16 : vector<8x128xf32> to vector<8x128xbf16>
    %c0_12 = arith.constant 0 : index
    %c0_13 = arith.constant 0 : index
    %18 = vector.load %arg6[%c0_12, %c0_13] : memref<128x128xbf16, #tpu.memory_space<vmem>>, vector<128x128xbf16>
    %cst_14 = arith.constant dense<0.000000e+00> : vector<8x128xf32>
    %19 = tpu.matmul %17, %18, %cst_14 {dimension_numbers = #tpu.dot_dimension_numbers<[1], [0], [0], [1], [0, 0, 1, 1], [], []>} : vector<8x128xbf16>, vector<128x128xbf16>, vector<8x128xf32> -> vector<8x128xf32>
    %c0_15 = arith.constant 0 : index
    %c0_16 = arith.constant 0 : index
    %20 = vector.load %arg7[%c0_15, %c0_16] : memref<1x128xf32, #tpu.memory_space<vmem>>, vector<1x128xf32>
    %21 = vector.broadcast %20 : vector<1x128xf32> to vector<8x128xf32>
    %22 = arith.addf %19, %21 : vector<8x128xf32>
    %cst_17 = arith.constant 0.000000e+00 : f32
    %23 = vector.broadcast %cst_17 : f32 to vector<8x128xf32>
    %24 = arith.maximumf %22, %23 : vector<8x128xf32>
    %25 = arith.truncf %24 : vector<8x128xf32> to vector<8x128xbf16>
    %c0_18 = arith.constant 0 : index
    %c0_19 = arith.constant 0 : index
    %26 = vector.load %arg8[%c0_18, %c0_19] : memref<128x128xbf16, #tpu.memory_space<vmem>>, vector<128x128xbf16>
    %cst_20 = arith.constant dense<0.000000e+00> : vector<8x128xf32>
    %27 = tpu.matmul %25, %26, %cst_20 {dimension_numbers = #tpu.dot_dimension_numbers<[1], [0], [0], [1], [0, 0, 1, 1], [], []>} : vector<8x128xbf16>, vector<128x128xbf16>, vector<8x128xf32> -> vector<8x128xf32>
    %c0_21 = arith.constant 0 : index
    %c0_22 = arith.constant 0 : index
    %28 = vector.load %arg9[%c0_21, %c0_22] : memref<1x128xf32, #tpu.memory_space<vmem>>, vector<1x128xf32>
    %29 = vector.broadcast %28 : vector<1x128xf32> to vector<8x128xf32>
    %30 = arith.addf %27, %29 : vector<8x128xf32>
    %cst_23 = arith.constant dense<0xFF800000> : vector<8xf32>
    %31 = vector.multi_reduction <maximumf>, %30, %cst_23 [1] : vector<8x128xf32> to vector<8xf32>
    %32 = vector.shape_cast %31 : vector<8xf32> to vector<8x1xf32>
    %33 = vector.broadcast %32 : vector<8x1xf32> to vector<8x128xf32>
    %34 = arith.subf %30, %33 : vector<8x128xf32>
    %35 = math.exp %34 : vector<8x128xf32>
    %cst_24 = arith.constant dense<0.000000e+00> : vector<8xf32>
    %36 = vector.multi_reduction <add>, %35, %cst_24 [1] : vector<8x128xf32> to vector<8xf32>
    %37 = vector.shape_cast %36 : vector<8xf32> to vector<8x1xf32>
    %38 = vector.broadcast %37 : vector<8x1xf32> to vector<8x128xf32>
    %39 = arith.divf %35, %38 : vector<8x128xf32>
    %40 = arith.truncf %39 : vector<8x128xf32> to vector<8x128xbf16>
    %c0_25 = arith.constant 0 : index
    %c0_26 = arith.constant 0 : index
    %41 = vector.load %arg10[%c0_25, %c0_26] : memref<8x128xbf16, #tpu.memory_space<vmem>>, vector<8x128xbf16>
    tpu.vector_store %arg10[%c0_25, %c0_26], %40 {strides = array<i32>} : memref<8x128xbf16, #tpu.memory_space<vmem>>, vector<8x128xbf16>,
    return
  }
  func.func @transform_0(%arg0: i32) -> (i32, i32) {
    %c0_i32 = arith.constant 0 : i32
    %c0_i32_0 = arith.constant 0 : i32
    return %arg0, %c0_i32 : i32, i32
  }
  func.func @transform_1(%arg0: i32) -> (i32, i32) {
    %c0_i32 = arith.constant 0 : i32
    %c0_i32_0 = arith.constant 0 : i32
    %c0_i32_1 = arith.constant 0 : i32
    return %c0_i32, %c0_i32_0 : i32, i32
  }
  func.func @transform_2(%arg0: i32) -> (i32, i32) {
    %c0_i32 = arith.constant 0 : i32
    %c0_i32_0 = arith.constant 0 : i32
    %c0_i32_1 = arith.constant 0 : i32
    return %c0_i32, %c0_i32_0 : i32, i32
  }
  func.func @transform_3(%arg0: i32) -> (i32, i32) {
    %c0_i32 = arith.constant 0 : i32
    %c0_i32_0 = arith.constant 0 : i32
    %c0_i32_1 = arith.constant 0 : i32
    return %c0_i32, %c0_i32_0 : i32, i32
  }
  func.func @transform_4(%arg0: i32) -> (i32, i32) {
    %c0_i32 = arith.constant 0 : i32
    %c0_i32_0 = arith.constant 0 : i32
    %c0_i32_1 = arith.constant 0 : i32
    return %c0_i32, %c0_i32_0 : i32, i32
  }
  func.func @transform_5(%arg0: i32) -> (i32, i32) {
    %c0_i32 = arith.constant 0 : i32
    %c0_i32_0 = arith.constant 0 : i32
    %c0_i32_1 = arith.constant 0 : i32
    return %c0_i32, %c0_i32_0 : i32, i32
  }
  func.func @transform_6(%arg0: i32) -> (i32, i32) {
    %c0_i32 = arith.constant 0 : i32
    %c0_i32_0 = arith.constant 0 : i32
    %c0_i32_1 = arith.constant 0 : i32
    return %c0_i32, %c0_i32_0 : i32, i32
  }
  func.func @transform_7(%arg0: i32) -> (i32, i32) {
    %c0_i32 = arith.constant 0 : i32
    %c0_i32_0 = arith.constant 0 : i32
    %c0_i32_1 = arith.constant 0 : i32
    return %c0_i32, %c0_i32_0 : i32, i32
  }
  func.func @transform_8(%arg0: i32) -> (i32, i32) {
    %c0_i32 = arith.constant 0 : i32
    %c0_i32_0 = arith.constant 0 : i32
    %c0_i32_1 = arith.constant 0 : i32
    return %c0_i32, %c0_i32_0 : i32, i32
  }
  func.func @transform_9(%arg0: i32) -> (i32, i32) {
    %c0_i32 = arith.constant 0 : i32
    %c0_i32_0 = arith.constant 0 : i32
    return %arg0, %c0_i32 : i32, i32
  }
}

</mosaic_0001>

<llo_original>
// kernel: tpu_custom_call.1
$region0: #{tpu_custom_call.1}
  #allocation0 [shape = 'u32[]', space=smem, size = 0x4, offset = 0x4, fixed_abs, tag = 'smem constant byte address 0x4 - core index']
  #allocation1 [shape = 'u32[144,128]{1,0:T(1,128)}', space=vmem, size = 0x12000, scoped, tag = 'internal scratch']
  %s0 = inlined_call_operand.hbm [shape: f32[8,784], index: 0, kind: input, shape index: {}]
  %s1 = inlined_call_operand.hbm [shape: bf16[784,256], index: 1, kind: input, shape index: {}]
  %s2 = inlined_call_operand.vmem [shape: f32[1,256], index: 2, kind: input, shape index: {}]
  %s3 = inlined_call_operand.hbm [shape: bf16[256,128], index: 3, kind: input, shape index: {}]
  %s4 = inlined_call_operand.vmem [shape: f32[1,128], index: 4, kind: input, shape index: {}]
  %s5 = inlined_call_operand.hbm [shape: bf16[128,128], index: 5, kind: input, shape index: {}]
  %s6 = inlined_call_operand.vmem [shape: f32[1,128], index: 6, kind: input, shape index: {}]
  %s7 = inlined_call_operand.hbm [shape: bf16[128,128], index: 7, kind: input, shape index: {}]
  %s8 = inlined_call_operand.vmem [shape: f32[1,128], index: 8, kind: input, shape index: {}]
  %s9 = inlined_call_operand.hbm [shape: bf16[8,128], index: 9, kind: output, shape index: {}]
  %s10 = sld [smem:[#allocation0]]
  $region66: #{tpu_custom_call.1} parent=0
    _
  %s12 = ssub.s32 1, %s10
  %s13 = scalar_select 0, %s12, %s10
  $region1: #{tpu_custom_call.1} parent=0
    #allocation2 [shape = 'u8[28672]{0}', space=vmem, size = 0x7000, scoped, tag = 'input window, operand 0, single buffered']
    #allocation3 [shape = 's32[1]{0}', space=sflag, size = 0x4, scoped, tag = 'scoped memory for tpu_custom_call.1']
    #allocation4 [shape = 's32[1]{0}', space=sflag, size = 0x4, scoped, tag = 'scoped memory for tpu_custom_call.1']
    #allocation5 [shape = 'u8[401408]{0}', space=vmem, size = 0x62000, scoped, tag = 'input window, operand 1, single buffered']
    #allocation6 [shape = 's32[1]{0}', space=sflag, size = 0x4, scoped, tag = 'scoped memory for tpu_custom_call.1']
    #allocation7 [shape = 'u8[65536]{0}', space=vmem, size = 0x10000, scoped, tag = 'input window, operand 3, single buffered']
    #allocation8 [shape = 'u8[32768]{0}', space=vmem, size = 0x8000, scoped, tag = 'input window, operand 5, single buffered']
    #allocation9 [shape = 's32[1]{0}', space=sflag, size = 0x4, scoped, tag = 'scoped memory for tpu_custom_call.1']
    #allocation10 [shape = 'u8[32768]{0}', space=vmem, size = 0x8000, scoped, tag = 'input window, operand 7, single buffered']
    #allocation11 [shape = 'u8[2048]{0}', space=vmem, size = 0x800, scoped, tag = 'output window, operand 0, single buffered']
    %14 = vsyncpa [#allocation3], 0
    %15 = vsyncpa [#allocation6], 0
    %16 = vsyncpa [#allocation9], 0
    %17 = vsyncpa [#allocation4], 0
    // Predicated region
    $region2: #{tpu_custom_call.1} parent=1 // pred_check
      _
    $region3: #{tpu_custom_call.1} parent=1 // pred_check_branch
      %19 = sbr.rel (0) target = $region5
    $region4: #{tpu_custom_call.1} parent=1 // pred_region
      %s21 = ssub.s32 896, 896
      %22 = vsyncadd [#allocation3], %s21
      %s24 = sshll.u32 [#allocation2], 4
      %s25 = int_to_ptr.vmem [resolvable:$true] %s24
      %27 = dma.hbm_to_vmem [thread:$0]  %s0, 896, %s25, [#allocation3]
    $region5: #{tpu_custom_call.1} parent=1 // pred_fallthru
      _
    // Predicated region
    $region6: #{tpu_custom_call.1} parent=1 // pred_check
      _
    $region7: #{tpu_custom_call.1} parent=1 // pred_check_branch
      %29 = sbr.rel (0) target = $region9
    $region8: #{tpu_custom_call.1} parent=1 // pred_region
      %s31 = ssub.s32 12544, 12544
      %32 = vsyncadd [#allocation6], %s31
      %s33 = sshll.u32 [#allocation5], 4
      %s34 = int_to_ptr.vmem [resolvable:$true] %s33
      %39 = dma.hbm_to_vmem [thread:$0]  %s1, 12544, %s34, [#allocation6], 128, 128, 8
    $region9: #{tpu_custom_call.1} parent=1 // pred_fallthru
      _
    // Predicated region
    $region10: #{tpu_custom_call.1} parent=1 // pred_check
      _
    $region11: #{tpu_custom_call.1} parent=1 // pred_check_branch
      %41 = sbr.rel (0) target = $region13
    $region12: #{tpu_custom_call.1} parent=1 // pred_region
      _
    $region13: #{tpu_custom_call.1} parent=1 // pred_fallthru
      _
    // Predicated region
    $region14: #{tpu_custom_call.1} parent=1 // pred_check
      _
    $region15: #{tpu_custom_call.1} parent=1 // pred_check_branch
      %43 = sbr.rel (0) target = $region17
    $region16: #{tpu_custom_call.1} parent=1 // pred_region
      %s45 = ssub.s32 2048, 2048
      %46 = vsyncadd [#allocation6], %s45
      %s47 = sshll.u32 [#allocation7], 4
      %s48 = int_to_ptr.vmem [resolvable:$true] %s47
      %53 = dma.hbm_to_vmem [thread:$0]  %s3, 2048, %s48, [#allocation6], 64, 64, 4
    $region17: #{tpu_custom_call.1} parent=1 // pred_fallthru
      _
    // Predicated region
    $region18: #{tpu_custom_call.1} parent=1 // pred_check
      _
    $region19: #{tpu_custom_call.1} parent=1 // pred_check_branch
      %55 = sbr.rel (0) target = $region21
    $region20: #{tpu_custom_call.1} parent=1 // pred_region
      _
    $region21: #{tpu_custom_call.1} parent=1 // pred_fallthru
      _
    // Predicated region
    $region22: #{tpu_custom_call.1} parent=1 // pred_check
      _
    $region23: #{tpu_custom_call.1} parent=1 // pred_check_branch
      %57 = sbr.rel (0) target = $region25
    $region24: #{tpu_custom_call.1} parent=1 // pred_region
      %s59 = ssub.s32 1024, 1024
      %60 = vsyncadd [#allocation9], %s59
      %s61 = sshll.u32 [#allocation8], 4
      %s62 = int_to_ptr.vmem [resolvable:$true] %s61
      %67 = dma.hbm_to_vmem [thread:$0]  %s5, 1024, %s62, [#allocation9], 64, 64, 4
    $region25: #{tpu_custom_call.1} parent=1 // pred_fallthru
      _
    // Predicated region
    $region26: #{tpu_custom_call.1} parent=1 // pred_check
      _
    $region27: #{tpu_custom_call.1} parent=1 // pred_check_branch
      %69 = sbr.rel (0) target = $region29
    $region28: #{tpu_custom_call.1} parent=1 // pred_region
      _
    $region29: #{tpu_custom_call.1} parent=1 // pred_fallthru
      _
    // Predicated region
    $region30: #{tpu_custom_call.1} parent=1 // pred_check
      _
    $region31: #{tpu_custom_call.1} parent=1 // pred_check_branch
      %71 = sbr.rel (0) target = $region33
    $region32: #{tpu_custom_call.1} parent=1 // pred_region
      %s73 = ssub.s32 1024, 1024
      %74 = vsyncadd [#allocation9], %s73
      %s75 = sshll.u32 [#allocation10], 4
      %s76 = int_to_ptr.vmem [resolvable:$true] %s75
      %81 = dma.hbm_to_vmem [thread:$0]  %s7, 1024, %s76, [#allocation9], 64, 64, 4
    $region33: #{tpu_custom_call.1} parent=1 // pred_fallthru
      _
    // Predicated region
    $region34: #{tpu_custom_call.1} parent=1 // pred_check
      _
    $region35: #{tpu_custom_call.1} parent=1 // pred_check_branch
      %83 = sbr.rel (0) target = $region37
    $region36: #{tpu_custom_call.1} parent=1 // pred_region
      _
    $region37: #{tpu_custom_call.1} parent=1 // pred_fallthru
      _
    // Predicated region
    $region38: #{tpu_custom_call.1} parent=1 // pred_check
      _
    $region39: #{tpu_custom_call.1} parent=1 // pred_check_branch
      %85 = sbr.rel (0) target = $region41
    $region40: #{tpu_custom_call.1} parent=1 // pred_region
      %86 = dma.done [#allocation3], 896
    $region41: #{tpu_custom_call.1} parent=1 // pred_fallthru
      _
    // Predicated region
    $region42: #{tpu_custom_call.1} parent=1 // pred_check
      _
    $region43: #{tpu_custom_call.1} parent=1 // pred_check_branch
      %88 = sbr.rel (0) target = $region45
    $region44: #{tpu_custom_call.1} parent=1 // pred_region
      %89 = dma.done [#allocation6], 12544
    $region45: #{tpu_custom_call.1} parent=1 // pred_fallthru
      _
    // Predicated region
    $region46: #{tpu_custom_call.1} parent=1 // pred_check
      _
    $region47: #{tpu_custom_call.1} parent=1 // pred_check_branch
      %91 = sbr.rel (0) target = $region49
    $region48: #{tpu_custom_call.1} parent=1 // pred_region
      %92 = dma.done [#allocation6], 2048
    $region49: #{tpu_custom_call.1} parent=1 // pred_fallthru
      _
    // Predicated region
    $region50: #{tpu_custom_call.1} parent=1 // pred_check
      _
    $region51: #{tpu_custom_call.1} parent=1 // pred_check_branch
      %94 = sbr.rel (0) target = $region53
    $region52: #{tpu_custom_call.1} parent=1 // pred_region
      %95 = dma.done [#allocation9], 1024
    $region53: #{tpu_custom_call.1} parent=1 // pred_fallthru
      _
    // Predicated region
    $region54: #{tpu_custom_call.1} parent=1 // pred_check
      _
    $region55: #{tpu_custom_call.1} parent=1 // pred_check_branch
      %97 = sbr.rel (0) target = $region57
    $region56: #{tpu_custom_call.1} parent=1 // pred_region
      %98 = dma.done [#allocation9], 1024
    $region57: #{tpu_custom_call.1} parent=1 // pred_fallthru
      _
    %v100 = vld [vmem:[#allocation2] sm:$0xff]
    %v101 = vld [vmem:[#allocation2 + $0x8] sm:$0xff]
    %v102 = vld [vmem:[#allocation2 + $0x10] sm:$0xff]
    %v103 = vld [vmem:[#allocation2 + $0x18] sm:$0xff]
    %v104 = vld [vmem:[#allocation2 + $0x20] sm:$0xff]
    %v105 = vld [vmem:[#allocation2 + $0x28] sm:$0xff]
    %v106 = vld [vmem:[#allocation2 + $0x30] sm:$0xff]
    %v107 = vpack.c.bf16 %v100, %v100
    %v108 = vpack.c.bf16 %v101, %v101
    %v109 = vpack.c.bf16 %v102, %v102
    %v110 = vpack.c.bf16 %v103, %v103
    %v111 = vpack.c.bf16 %v104, %v104
    %v112 = vpack.c.bf16 %v105, %v105
    %v113 = vpack.c.bf16 %v106, %v106
    %v114 = vld [vmem:[#allocation5] sm:$0xff]
    %v115 = vld [vmem:[#allocation5 + $0x8] sm:$0xff]
    %v116 = vld [vmem:[#allocation5 + $0x10] sm:$0xff]
    %v117 = vld [vmem:[#allocation5 + $0x18] sm:$0xff]
    %v118 = vld [vmem:[#allocation5 + $0x20] sm:$0xff]
    %v119 = vld [vmem:[#allocation5 + $0x28] sm:$0xff]
    %v120 = vld [vmem:[#allocation5 + $0x30] sm:$0xff]
    %v121 = vld [vmem:[#allocation5 + $0x38] sm:$0xff]
    %v122 = vld [vmem:[#allocation5 + $0x40] sm:$0xff]
    %v123 = vld [vmem:[#allocation5 + $0x48] sm:$0xff]
    %v124 = vld [vmem:[#allocation5 + $0x50] sm:$0xff]
    %v125 = vld [vmem:[#allocation5 + $0x58] sm:$0xff]
    %v126 = vld [vmem:[#allocation5 + $0x60] sm:$0xff]
    %v127 = vld [vmem:[#allocation5 + $0x68] sm:$0xff]
    %v128 = vld [vmem:[#allocation5 + $0x70] sm:$0xff]
    %v129 = vld [vmem:[#allocation5 + $0x78] sm:$0xff]
    %v130 = vld [vmem:[#allocation5 + $0x80] sm:$0xff]
    %v131 = vld [vmem:[#allocation5 + $0x88] sm:$0xff]
    %v132 = vld [vmem:[#allocation5 + $0x90] sm:$0xff]
    %v133 = vld [vmem:[#allocation5 + $0x98] sm:$0xff]
    %v134 = vld [vmem:[#allocation5 + $0xa0] sm:$0xff]
    %v135 = vld [vmem:[#allocation5 + $0xa8] sm:$0xff]
    %v136 = vld [vmem:[#allocation5 + $0xb0] sm:$0xff]
    %v137 = vld [vmem:[#allocation5 + $0xb8] sm:$0xff]
    %v138 = vld [vmem:[#allocation5 + $0xc0] sm:$0xff]
    %v139 = vld [vmem:[#allocation5 + $0xc8] sm:$0xff]
    %v140 = vld [vmem:[#allocation5 + $0xd0] sm:$0xff]
    %v141 = vld [vmem:[#allocation5 + $0xd8] sm:$0xff]
    %v142 = vld [vmem:[#allocation5 + $0xe0] sm:$0xff]
    %v143 = vld [vmem:[#allocation5 + $0xe8] sm:$0xff]
    %v144 = vld [vmem:[#allocation5 + $0xf0] sm:$0xff]
    %v145 = vld [vmem:[#allocation5 + $0xf8] sm:$0xff]
    %v146 = vld [vmem:[#allocation5 + $0x100] sm:$0xff]
    %v147 = vld [vmem:[#allocation5 + $0x108] sm:$0xff]
    %v148 = vld [vmem:[#allocation5 + $0x110] sm:$0xff]
    %v149 = vld [vmem:[#allocation5 + $0x118] sm:$0xff]
    %v150 = vld [vmem:[#allocation5 + $0x120] sm:$0xff]
    %v151 = vld [vmem:[#allocation5 + $0x128] sm:$0xff]
    %v152 = vld [vmem:[#allocation5 + $0x130] sm:$0xff]
    %v153 = vld [vmem:[#allocation5 + $0x138] sm:$0xff]
    %v154 = vld [vmem:[#allocation5 + $0x140] sm:$0xff]
    %v155 = vld [vmem:[#allocation5 + $0x148] sm:$0xff]
    %v156 = vld [vmem:[#allocation5 + $0x150] sm:$0xff]
    %v157 = vld [vmem:[#allocation5 + $0x158] sm:$0xff]
    %v158 = vld [vmem:[#allocation5 + $0x160] sm:$0xff]
    %v159 = vld [vmem:[#allocation5 + $0x168] sm:$0xff]
    %v160 = vld [vmem:[#allocation5 + $0x170] sm:$0xff]
    %v161 = vld [vmem:[#allocation5 + $0x178] sm:$0xff]
    %v162 = vld [vmem:[#allocation5 + $0x180] sm:$0xff]
    %v163 = vld [vmem:[#allocation5 + $0x188] sm:$0xff]
    %v164 = vld [vmem:[#allocation5 + $0x190] sm:$0xff]
    %v165 = vld [vmem:[#allocation5 + $0x198] sm:$0xff]
    %v166 = vld [vmem:[#allocation5 + $0x1a0] sm:$0xff]
    %v167 = vld [vmem:[#allocation5 + $0x1a8] sm:$0xff]
    %v168 = vld [vmem:[#allocation5 + $0x1b0] sm:$0xff]
    %v169 = vld [vmem:[#allocation5 + $0x1b8] sm:$0xff]
    %v170 = vld [vmem:[#allocation5 + $0x1c0] sm:$0xff]
    %v171 = vld [vmem:[#allocation5 + $0x1c8] sm:$0xff]
    %v172 = vld [vmem:[#allocation5 + $0x1d0] sm:$0xff]
    %v173 = vld [vmem:[#allocation5 + $0x1d8] sm:$0xff]
    %v174 = vld [vmem:[#allocation5 + $0x1e0] sm:$0xff]
    %v175 = vld [vmem:[#allocation5 + $0x1e8] sm:$0xff]
    %v176 = vld [vmem:[#allocation5 + $0x1f0] sm:$0xff]
    %v177 = vld [vmem:[#allocation5 + $0x1f8] sm:$0xff]
    %v178 = vld [vmem:[#allocation5 + $0x200] sm:$0xff]
    %v179 = vld [vmem:[#allocation5 + $0x208] sm:$0xff]
    %v180 = vld [vmem:[#allocation5 + $0x210] sm:$0xff]
    %v181 = vld [vmem:[#allocation5 + $0x218] sm:$0xff]
    %v182 = vld [vmem:[#allocation5 + $0x220] sm:$0xff]
    %v183 = vld [vmem:[#allocation5 + $0x228] sm:$0xff]
    %v184 = vld [vmem:[#allocation5 + $0x230] sm:$0xff]
    %v185 = vld [vmem:[#allocation5 + $0x238] sm:$0xff]
    %v186 = vld [vmem:[#allocation5 + $0x240] sm:$0xff]
    %v187 = vld [vmem:[#allocation5 + $0x248] sm:$0xff]
    %v188 = vld [vmem:[#allocation5 + $0x250] sm:$0xff]
    %v189 = vld [vmem:[#allocation5 + $0x258] sm:$0xff]
    %v190 = vld [vmem:[#allocation5 + $0x260] sm:$0xff]
    %v191 = vld [vmem:[#allocation5 + $0x268] sm:$0xff]
    %v192 = vld [vmem:[#allocation5 + $0x270] sm:$0xff]
    %v193 = vld [vmem:[#allocation5 + $0x278] sm:$0xff]
    %v194 = vld [vmem:[#allocation5 + $0x280] sm:$0xff]
    %v195 = vld [vmem:[#allocation5 + $0x288] sm:$0xff]
    %v196 = vld [vmem:[#allocation5 + $0x290] sm:$0xff]
    %v197 = vld [vmem:[#allocation5 + $0x298] sm:$0xff]
    %v198 = vld [vmem:[#allocation5 + $0x2a0] sm:$0xff]
    %v199 = vld [vmem:[#allocation5 + $0x2a8] sm:$0xff]
    %v200 = vld [vmem:[#allocation5 + $0x2b0] sm:$0xff]
    %v201 = vld [vmem:[#allocation5 + $0x2b8] sm:$0xff]
    %v202 = vld [vmem:[#allocation5 + $0x2c0] sm:$0xff]
    %v203 = vld [vmem:[#allocation5 + $0x2c8] sm:$0xff]
    %v204 = vld [vmem:[#allocation5 + $0x2d0] sm:$0xff]
    %v205 = vld [vmem:[#allocation5 + $0x2d8] sm:$0xff]
    %v206 = vld [vmem:[#allocation5 + $0x2e0] sm:$0xff]
    %v207 = vld [vmem:[#allocation5 + $0x2e8] sm:$0xff]
    %v208 = vld [vmem:[#allocation5 + $0x2f0] sm:$0xff]
    %v209 = vld [vmem:[#allocation5 + $0x2f8] sm:$0xff]
    %v210 = vld [vmem:[#allocation5 + $0x300] sm:$0xff]
    %v211 = vld [vmem:[#allocation5 + $0x308] sm:$0xff]
    %v212 = vld [vmem:[%s2] sm:$0x3]
    %v214 = vlaneseq
    %v215 = vshrl.u32 %v214, 7
    %v216 = vsub.s32 0, %v215
    %v217 = vrot.slane %v212, %v216
    %v218 = vlaneseq
    %v219 = vshrl.u32 %v218, 7
    %v220 = vsub.s32 1, %v219
    %v221 = vrot.slane %v212, %v220
    %v322 = vunpack.c.l.b16 %v114
    %v323 = vunpack.c.h.b16 %v114
    %v324 = vunpack.c.l.b16 %v115
    %v325 = vunpack.c.h.b16 %v115
    %v326 = vunpack.c.l.b16 %v116
    %v327 = vunpack.c.h.b16 %v116
    %v328 = vunpack.c.l.b16 %v117
    %v329 = vunpack.c.h.b16 %v117
    %v330 = vunpack.c.l.b16 %v118
    %v331 = vunpack.c.h.b16 %v118
    %v332 = vunpack.c.l.b16 %v119
    %v333 = vunpack.c.h.b16 %v119
    %v334 = vunpack.c.l.b16 %v120
    %v335 = vunpack.c.h.b16 %v120
    %v336 = vunpack.c.l.b16 %v121
    %v337 = vunpack.c.h.b16 %v121
    %v338 = vunpack.c.l.b16 %v122
    %v339 = vunpack.c.h.b16 %v122
    %v340 = vunpack.c.l.b16 %v123
    %v341 = vunpack.c.h.b16 %v123
    %v342 = vunpack.c.l.b16 %v124
    %v343 = vunpack.c.h.b16 %v124
    %v344 = vunpack.c.l.b16 %v125
    %v345 = vunpack.c.h.b16 %v125
    %v346 = vunpack.c.l.b16 %v126
    %v347 = vunpack.c.h.b16 %v126
    %v348 = vunpack.c.l.b16 %v127
    %v349 = vunpack.c.h.b16 %v127
    %v350 = vunpack.c.l.b16 %v128
    %v351 = vunpack.c.h.b16 %v128
    %v352 = vunpack.c.l.b16 %v129
    %v353 = vunpack.c.h.b16 %v129
    %v354 = vunpack.c.l.b16 %v130
    %v355 = vunpack.c.h.b16 %v130
    %v356 = vunpack.c.l.b16 %v131
    %v357 = vunpack.c.h.b16 %v131
    %v358 = vunpack.c.l.b16 %v132
    %v359 = vunpack.c.h.b16 %v132
    %v360 = vunpack.c.l.b16 %v133
    %v361 = vunpack.c.h.b16 %v133
    %v362 = vunpack.c.l.b16 %v134
    %v363 = vunpack.c.h.b16 %v134
    %v364 = vunpack.c.l.b16 %v135
    %v365 = vunpack.c.h.b16 %v135
    %v366 = vunpack.c.l.b16 %v136
    %v367 = vunpack.c.h.b16 %v136
    %v368 = vunpack.c.l.b16 %v137
    %v369 = vunpack.c.h.b16 %v137
    %v370 = vunpack.c.l.b16 %v138
    %v371 = vunpack.c.h.b16 %v138
    %v372 = vunpack.c.l.b16 %v139
    %v373 = vunpack.c.h.b16 %v139
    %v374 = vunpack.c.l.b16 %v140
    %v375 = vunpack.c.h.b16 %v140
    %v376 = vunpack.c.l.b16 %v141
    %v377 = vunpack.c.h.b16 %v141
    %v378 = vunpack.c.l.b16 %v142
    %v379 = vunpack.c.h.b16 %v142
    %v380 = vunpack.c.l.b16 %v143
    %v381 = vunpack.c.h.b16 %v143
    %v382 = vunpack.c.l.b16 %v144
    %v383 = vunpack.c.h.b16 %v144
    %v384 = vunpack.c.l.b16 %v145
    %v385 = vunpack.c.h.b16 %v145
    %v386 = vunpack.c.l.b16 %v146
    %v387 = vunpack.c.h.b16 %v146
    %v388 = vunpack.c.l.b16 %v147
    %v389 = vunpack.c.h.b16 %v147
    %v390 = vunpack.c.l.b16 %v148
    %v391 = vunpack.c.h.b16 %v148
    %v392 = vunpack.c.l.b16 %v149
    %v393 = vunpack.c.h.b16 %v149
    %v394 = vunpack.c.l.b16 %v150
    %v395 = vunpack.c.h.b16 %v150
    %v396 = vunpack.c.l.b16 %v151
    %v397 = vunpack.c.h.b16 %v151
    %v398 = vunpack.c.l.b16 %v152
    %v399 = vunpack.c.h.b16 %v152
    %v400 = vunpack.c.l.b16 %v153
    %v401 = vunpack.c.h.b16 %v153
    %v402 = vunpack.c.l.b16 %v154
    %v403 = vunpack.c.h.b16 %v154
    %v404 = vunpack.c.l.b16 %v155
    %v405 = vunpack.c.h.b16 %v155
    %v406 = vunpack.c.l.b16 %v156
    %v407 = vunpack.c.h.b16 %v156
    %v408 = vunpack.c.l.b16 %v157
    %v409 = vunpack.c.h.b16 %v157
    %v410 = vunpack.c.l.b16 %v158
    %v411 = vunpack.c.h.b16 %v158
    %v412 = vunpack.c.l.b16 %v159
    %v413 = vunpack.c.h.b16 %v159
    %v414 = vunpack.c.l.b16 %v160
    %v415 = vunpack.c.h.b16 %v160
    %v416 = vunpack.c.l.b16 %v161
    %v417 = vunpack.c.h.b16 %v161
    %v418 = vunpack.c.l.b16 %v162
    %v419 = vunpack.c.h.b16 %v162
    %v420 = vunpack.c.l.b16 %v163
    %v421 = vunpack.c.h.b16 %v163
    %v422 = vunpack.c.l.b16 %v164
    %v423 = vunpack.c.h.b16 %v164
    %v424 = vunpack.c.l.b16 %v165
    %v425 = vunpack.c.h.b16 %v165
    %v426 = vunpack.c.l.b16 %v166
    %v427 = vunpack.c.h.b16 %v166
    %v428 = vunpack.c.l.b16 %v167
    %v429 = vunpack.c.h.b16 %v167
    %v430 = vunpack.c.l.b16 %v168
    %v431 = vunpack.c.h.b16 %v168
    %v432 = vunpack.c.l.b16 %v169
    %v433 = vunpack.c.h.b16 %v169
    %v434 = vunpack.c.l.b16 %v170
    %v435 = vunpack.c.h.b16 %v170
    %v436 = vunpack.c.l.b16 %v171
    %v437 = vunpack.c.h.b16 %v171
    %v438 = vunpack.c.l.b16 %v172
    %v439 = vunpack.c.h.b16 %v172
    %v440 = vunpack.c.l.b16 %v173
    %v441 = vunpack.c.h.b16 %v173
    %v442 = vunpack.c.l.b16 %v174
    %v443 = vunpack.c.h.b16 %v174
    %v444 = vunpack.c.l.b16 %v175
    %v445 = vunpack.c.h.b16 %v175
    %v446 = vunpack.c.l.b16 %v176
    %v447 = vunpack.c.h.b16 %v176
    %v448 = vunpack.c.l.b16 %v177
    %v449 = vunpack.c.h.b16 %v177
    %v450 = vunpack.c.l.b16 %v178
    %v451 = vunpack.c.h.b16 %v178
    %v452 = vunpack.c.l.b16 %v179
    %v453 = vunpack.c.h.b16 %v179
    %v454 = vunpack.c.l.b16 %v180
    %v455 = vunpack.c.h.b16 %v180
    %v456 = vunpack.c.l.b16 %v181
    %v457 = vunpack.c.h.b16 %v181
    %v458 = vunpack.c.l.b16 %v182
    %v459 = vunpack.c.h.b16 %v182
    %v460 = vunpack.c.l.b16 %v183
    %v461 = vunpack.c.h.b16 %v183
    %v462 = vunpack.c.l.b16 %v184
    %v463 = vunpack.c.h.b16 %v184
    %v464 = vunpack.c.l.b16 %v185
    %v465 = vunpack.c.h.b16 %v185
    %v466 = vunpack.c.l.b16 %v186
    %v467 = vunpack.c.h.b16 %v186
    %v468 = vunpack.c.l.b16 %v187
    %v469 = vunpack.c.h.b16 %v187
    %v470 = vunpack.c.l.b16 %v188
    %v471 = vunpack.c.h.b16 %v188
    %v472 = vunpack.c.l.b16 %v189
    %v473 = vunpack.c.h.b16 %v189
    %v474 = vunpack.c.l.b16 %v190
    %v475 = vunpack.c.h.b16 %v190
    %v476 = vunpack.c.l.b16 %v191
    %v477 = vunpack.c.h.b16 %v191
    %v478 = vunpack.c.l.b16 %v192
    %v479 = vunpack.c.h.b16 %v192
    %v480 = vunpack.c.l.b16 %v193
    %v481 = vunpack.c.h.b16 %v193
    %v482 = vunpack.c.l.b16 %v194
    %v483 = vunpack.c.h.b16 %v194
    %v484 = vunpack.c.l.b16 %v195
    %v485 = vunpack.c.h.b16 %v195
    %v486 = vunpack.c.l.b16 %v196
    %v487 = vunpack.c.h.b16 %v196
    %v488 = vunpack.c.l.b16 %v197
    %v489 = vunpack.c.h.b16 %v197
    %v490 = vunpack.c.l.b16 %v198
    %v491 = vunpack.c.h.b16 %v198
    %v492 = vunpack.c.l.b16 %v199
    %v493 = vunpack.c.h.b16 %v199
    %v494 = vunpack.c.l.b16 %v200
    %v495 = vunpack.c.h.b16 %v200
    %v496 = vunpack.c.l.b16 %v201
    %v497 = vunpack.c.h.b16 %v201
    %v498 = vunpack.c.l.b16 %v202
    %v499 = vunpack.c.h.b16 %v202
    %v500 = vunpack.c.l.b16 %v203
    %v501 = vunpack.c.h.b16 %v203
    %v502 = vunpack.c.l.b16 %v204
    %v503 = vunpack.c.h.b16 %v204
    %v504 = vunpack.c.l.b16 %v205
    %v505 = vunpack.c.h.b16 %v205
    %v506 = vunpack.c.l.b16 %v206
    %v507 = vunpack.c.h.b16 %v206
    %v508 = vunpack.c.l.b16 %v207
    %v509 = vunpack.c.h.b16 %v207
    %v510 = vunpack.c.l.b16 %v208
    %v511 = vunpack.c.h.b16 %v208
    %v512 = vunpack.c.l.b16 %v209
    %v513 = vunpack.c.h.b16 %v209
    %v514 = vunpack.c.l.b16 %v210
    %v515 = vunpack.c.h.b16 %v210
    %v516 = vunpack.c.l.b16 %v211
    %v517 = vunpack.c.h.b16 %v211
    %v518 = vpack.c.b16 %v324, %v322
    %v519 = vpack.c.b16 %v325, %v323
    %v520 = vpack.c.b16 %v328, %v326
    %v521 = vpack.c.b16 %v329, %v327
    %v522 = vpack.c.b16 %v332, %v330
    %v523 = vpack.c.b16 %v333, %v331
    %v524 = vpack.c.b16 %v336, %v334
    %v525 = vpack.c.b16 %v337, %v335
    %v526 = vpack.c.b16 %v340, %v338
    %v527 = vpack.c.b16 %v341, %v339
    %v528 = vpack.c.b16 %v344, %v342
    %v529 = vpack.c.b16 %v345, %v343
    %v530 = vpack.c.b16 %v348, %v346
    %v531 = vpack.c.b16 %v349, %v347
    %v532 = vpack.c.b16 %v352, %v350
    %v533 = vpack.c.b16 %v353, %v351
    %v534 = vpack.c.b16 %v356, %v354
    %v535 = vpack.c.b16 %v357, %v355
    %v536 = vpack.c.b16 %v360, %v358
    %v537 = vpack.c.b16 %v361, %v359
    %v538 = vpack.c.b16 %v364, %v362
    %v539 = vpack.c.b16 %v365, %v363
    %v540 = vpack.c.b16 %v368, %v366
    %v541 = vpack.c.b16 %v369, %v367
    %v542 = vpack.c.b16 %v372, %v370
    %v543 = vpack.c.b16 %v373, %v371
    %v544 = vpack.c.b16 %v376, %v374
    %v545 = vpack.c.b16 %v377, %v375
    %v546 = vpack.c.b16 %v380, %v378
    %v547 = vpack.c.b16 %v381, %v379
    %v548 = vpack.c.b16 %v384, %v382
    %v549 = vpack.c.b16 %v385, %v383
    %v550 = vpack.c.b16 %v388, %v386
    %v551 = vpack.c.b16 %v389, %v387
    %v552 = vpack.c.b16 %v392, %v390
    %v553 = vpack.c.b16 %v393, %v391
    %v554 = vpack.c.b16 %v396, %v394
    %v555 = vpack.c.b16 %v397, %v395
    %v556 = vpack.c.b16 %v400, %v398
    %v557 = vpack.c.b16 %v401, %v399
    %v558 = vpack.c.b16 %v404, %v402
    %v559 = vpack.c.b16 %v405, %v403
    %v560 = vpack.c.b16 %v408, %v406
    %v561 = vpack.c.b16 %v409, %v407
    %v562 = vpack.c.b16 %v412, %v410
    %v563 = vpack.c.b16 %v413, %v411
    %v564 = vpack.c.b16 %v416, %v414
    %v565 = vpack.c.b16 %v417, %v415
    %v566 = vpack.c.b16 %v420, %v418
    %v567 = vpack.c.b16 %v421, %v419
    %v568 = vpack.c.b16 %v424, %v422
    %v569 = vpack.c.b16 %v425, %v423
    %v570 = vpack.c.b16 %v428, %v426
    %v571 = vpack.c.b16 %v429, %v427
    %v572 = vpack.c.b16 %v432, %v430
    %v573 = vpack.c.b16 %v433, %v431
    %v574 = vpack.c.b16 %v436, %v434
    %v575 = vpack.c.b16 %v437, %v435
    %v576 = vpack.c.b16 %v440, %v438
    %v577 = vpack.c.b16 %v441, %v439
    %v578 = vpack.c.b16 %v444, %v442
    %v579 = vpack.c.b16 %v445, %v443
    %v580 = vpack.c.b16 %v448, %v446
    %v581 = vpack.c.b16 %v449, %v447
    %v582 = vpack.c.b16 %v452, %v450
    %v583 = vpack.c.b16 %v453, %v451
    %v584 = vpack.c.b16 %v456, %v454
    %v585 = vpack.c.b16 %v457, %v455
    %v586 = vpack.c.b16 %v460, %v458
    %v587 = vpack.c.b16 %v461, %v459
    %v588 = vpack.c.b16 %v464, %v462
    %v589 = vpack.c.b16 %v465, %v463
    %v590 = vpack.c.b16 %v468, %v466
    %v591 = vpack.c.b16 %v469, %v467
    %v592 = vpack.c.b16 %v472, %v470
    %v593 = vpack.c.b16 %v473, %v471
    %v594 = vpack.c.b16 %v476, %v474
    %v595 = vpack.c.b16 %v477, %v475
    %v596 = vpack.c.b16 %v480, %v478
    %v597 = vpack.c.b16 %v481, %v479
    %v598 = vpack.c.b16 %v484, %v482
    %v599 = vpack.c.b16 %v485, %v483
    %v600 = vpack.c.b16 %v488, %v486
    %v601 = vpack.c.b16 %v489, %v487
    %v602 = vpack.c.b16 %v492, %v490
    %v603 = vpack.c.b16 %v493, %v491
    %v604 = vpack.c.b16 %v496, %v494
    %v605 = vpack.c.b16 %v497, %v495
    %v606 = vpack.c.b16 %v500, %v498
    %v607 = vpack.c.b16 %v501, %v499
    %v608 = vpack.c.b16 %v504, %v502
    %v609 = vpack.c.b16 %v505, %v503
    %v610 = vpack.c.b16 %v508, %v506
    %v611 = vpack.c.b16 %v509, %v507
    %v612 = vpack.c.b16 %v512, %v510
    %v613 = vpack.c.b16 %v513, %v511
    %v614 = vpack.c.b16 %v516, %v514
    %v615 = vpack.c.b16 %v517, %v515
    %vm714 = vcmask 130048
    %v716 = vsel %vm714, %v113, 0
    %718 = vmatprep.subr.bf16.mxu0 %v533
    %719 = vmatpush1.bf16.msra.mxu0 %v532
    %720 = vmatprep.subr.bf16.mxu0 %v531
    %721 = vmatpush1.bf16.msra.mxu0 %v530
    %722 = vmatprep.subr.bf16.mxu0 %v529
    %723 = vmatpush1.bf16.msra.mxu0 %v528
    %724 = vmatprep.subr.bf16.mxu0 %v527
    %725 = vmatpush1.bf16.msra.mxu0 %v526
    %726 = vmatprep.subr.bf16.mxu0 %v525
    %727 = vmatpush1.bf16.msra.mxu0 %v524
    %728 = vmatprep.subr.bf16.mxu0 %v523
    %729 = vmatpush1.bf16.msra.mxu0 %v522
    %730 = vmatprep.subr.bf16.mxu0 %v521
    %731 = vmatpush1.bf16.msra.mxu0 %v520
    %732 = vmatprep.subr.bf16.mxu0 %v519
    %733 = vmatpush1.bf16.msra.mxu0 %v518
    %734 = vmatprep.subr.bf16.mxu0 %v549
    %735 = vmatpush2.bf16.msra.mxu0 %v548
    %736 = vmatprep.subr.bf16.mxu0 %v547
    %737 = vmatpush2.bf16.msra.mxu0 %v546
    %738 = vmatprep.subr.bf16.mxu0 %v545
    %739 = vmatpush2.bf16.msra.mxu0 %v544
    %740 = vmatprep.subr.bf16.mxu0 %v543
    %741 = vmatpush2.bf16.msra.mxu0 %v542
    %742 = vmatprep.subr.bf16.mxu0 %v541
    %743 = vmatpush2.bf16.msra.mxu0 %v540
    %744 = vmatprep.subr.bf16.mxu0 %v539
    %745 = vmatpush2.bf16.msra.mxu0 %v538
    %746 = vmatprep.subr.bf16.mxu0 %v537
    %747 = vmatpush2.bf16.msra.mxu0 %v536
    %748 = vmatprep.subr.bf16.mxu0 %v535
    %749 = vmatpush2.bf16.msra.mxu0 %v534
    %750 = vmatprep.mubr.bf16.mxu0 %v108
    %751 = vmatmul.mubr.bf16.gmra.mxu0 %v107
    %v752 = vpop.f32.mrf.mxu0
    %v753 = vadd.f32 %v217, %v752
    %v754 = vpop.f32.mrf.mxu0
    %v755 = vadd.f32 %v221, %v754
    %v756 = vpop.f32.mrf.mxu0
    %v757 = vpop.f32.mrf.mxu0
    %758 = vdwg.mxu0
    %759 = vmatprep.subr.bf16.mxu0 %v565
    %760 = vmatpush1.bf16.msra.mxu0 %v564
    %761 = vmatprep.subr.bf16.mxu0 %v563
    %762 = vmatpush1.bf16.msra.mxu0 %v562
    %763 = vmatprep.subr.bf16.mxu0 %v561
    %764 = vmatpush1.bf16.msra.mxu0 %v560
    %765 = vmatprep.subr.bf16.mxu0 %v559
    %766 = vmatpush1.bf16.msra.mxu0 %v558
    %767 = vmatprep.subr.bf16.mxu0 %v557
    %768 = vmatpush1.bf16.msra.mxu0 %v556
    %769 = vmatprep.subr.bf16.mxu0 %v555
    %770 = vmatpush1.bf16.msra.mxu0 %v554
    %771 = vmatprep.subr.bf16.mxu0 %v553
    %772 = vmatpush1.bf16.msra.mxu0 %v552
    %773 = vmatprep.subr.bf16.mxu0 %v551
    %774 = vmatpush1.bf16.msra.mxu0 %v550
    %775 = vmatprep.subr.bf16.mxu0 %v581
    %776 = vmatpush2.bf16.msra.mxu0 %v580
    %777 = vmatprep.subr.bf16.mxu0 %v579
    %778 = vmatpush2.bf16.msra.mxu0 %v578
    %779 = vmatprep.subr.bf16.mxu0 %v577
    %780 = vmatpush2.bf16.msra.mxu0 %v576
    %781 = vmatprep.subr.bf16.mxu0 %v575
    %782 = vmatpush2.bf16.msra.mxu0 %v574
    %783 = vmatprep.subr.bf16.mxu0 %v573
    %784 = vmatpush2.bf16.msra.mxu0 %v572
    %785 = vmatprep.subr.bf16.mxu0 %v571
    %786 = vmatpush2.bf16.msra.mxu0 %v570
    %787 = vmatprep.subr.bf16.mxu0 %v569
    %788 = vmatpush2.bf16.msra.mxu0 %v568
    %789 = vmatprep.subr.bf16.mxu0 %v567
    %790 = vmatpush2.bf16.msra.mxu0 %v566
    %791 = vmatprep.mubr.bf16.mxu0 %v110
    %792 = vmatmul.mubr.bf16.gmra.mxu0 %v109
    %v793 = vpop.f32.mrf.mxu0
    %v794 = vadd.f32 %v753, %v793
    %v795 = vpop.f32.mrf.mxu0
    %v796 = vadd.f32 %v755, %v795
    %v797 = vpop.f32.mrf.mxu0
    %v798 = vpop.f32.mrf.mxu0
    %799 = vdwg.mxu0
    %800 = vmatprep.subr.bf16.mxu0 %v597
    %801 = vmatpush1.bf16.msra.mxu0 %v596
    %802 = vmatprep.subr.bf16.mxu0 %v595
    %803 = vmatpush1.bf16.msra.mxu0 %v594
    %804 = vmatprep.subr.bf16.mxu0 %v593
    %805 = vmatpush1.bf16.msra.mxu0 %v592
    %806 = vmatprep.subr.bf16.mxu0 %v591
    %807 = vmatpush1.bf16.msra.mxu0 %v590
    %808 = vmatprep.subr.bf16.mxu0 %v589
    %809 = vmatpush1.bf16.msra.mxu0 %v588
    %810 = vmatprep.subr.bf16.mxu0 %v587
    %811 = vmatpush1.bf16.msra.mxu0 %v586
    %812 = vmatprep.subr.bf16.mxu0 %v585
    %813 = vmatpush1.bf16.msra.mxu0 %v584
    %814 = vmatprep.subr.bf16.mxu0 %v583
    %815 = vmatpush1.bf16.msra.mxu0 %v582
    %816 = vmatprep.subr.bf16.mxu0 %v613
    %817 = vmatpush2.bf16.msra.mxu0 %v612
    %818 = vmatprep.subr.bf16.mxu0 %v611
    %819 = vmatpush2.bf16.msra.mxu0 %v610
    %820 = vmatprep.subr.bf16.mxu0 %v609
    %821 = vmatpush2.bf16.msra.mxu0 %v608
    %822 = vmatprep.subr.bf16.mxu0 %v607
    %823 = vmatpush2.bf16.msra.mxu0 %v606
    %824 = vmatprep.subr.bf16.mxu0 %v605
    %825 = vmatpush2.bf16.msra.mxu0 %v604
    %826 = vmatprep.subr.bf16.mxu0 %v603
    %827 = vmatpush2.bf16.msra.mxu0 %v602
    %828 = vmatprep.subr.bf16.mxu0 %v601
    %829 = vmatpush2.bf16.msra.mxu0 %v600
    %830 = vmatprep.subr.bf16.mxu0 %v599
    %831 = vmatpush2.bf16.msra.mxu0 %v598
    %832 = vmatprep.mubr.bf16.mxu0 %v112
    %833 = vmatmul.mubr.bf16.gmra.mxu0 %v111
    %v834 = vpop.f32.mrf.mxu0
    %v835 = vadd.f32 %v794, %v834
    %v836 = vpop.f32.mrf.mxu0
    %v837 = vadd.f32 %v796, %v836
    %v838 = vpop.f32.mrf.mxu0
    %v839 = vpop.f32.mrf.mxu0
    %840 = vdwg.mxu0
    %841 = vmatprep.subr.bf16.mxu0 0
    %842 = vmatpush1.bf16.msra.mxu0 0
    %843 = vmatprep.subr.bf16.mxu0 0
    %844 = vmatpush1.bf16.msra.mxu0 0
    %845 = vmatprep.subr.bf16.mxu0 0
    %846 = vmatpush1.bf16.msra.mxu0 0
    %847 = vmatprep.subr.bf16.mxu0 0
    %848 = vmatpush1.bf16.msra.mxu0 0
    %849 = vmatprep.subr.bf16.mxu0 0
    %850 = vmatpush1.bf16.msra.mxu0 0
    %851 = vmatprep.subr.bf16.mxu0 0
    %852 = vmatpush1.bf16.msra.mxu0 0
    %853 = vmatprep.subr.bf16.mxu0 0
    %854 = vmatpush1.bf16.msra.mxu0 0
    %855 = vmatprep.subr.bf16.mxu0 %v615
    %856 = vmatpush1.bf16.msra.mxu0 %v614
    %857 = vmatprep.subr.bf16.mxu0 0
    %858 = vmatpush2.bf16.msra.mxu0 0
    %859 = vmatprep.subr.bf16.mxu0 0
    %860 = vmatpush2.bf16.msra.mxu0 0
    %861 = vmatprep.subr.bf16.mxu0 0
    %862 = vmatpush2.bf16.msra.mxu0 0
    %863 = vmatprep.subr.bf16.mxu0 0
    %864 = vmatpush2.bf16.msra.mxu0 0
    %865 = vmatprep.subr.bf16.mxu0 0
    %866 = vmatpush2.bf16.msra.mxu0 0
    %867 = vmatprep.subr.bf16.mxu0 0
    %868 = vmatpush2.bf16.msra.mxu0 0
    %869 = vmatprep.subr.bf16.mxu0 0
    %870 = vmatpush2.bf16.msra.mxu0 0
    %871 = vmatprep.subr.bf16.mxu0 0
    %872 = vmatpush2.bf16.msra.mxu0 0
    %873 = vmatprep.mubr.bf16.mxu0 0
    %874 = vmatmul.mubr.bf16.gmra.mxu0 %v716
    %v875 = vpop.f32.mrf.mxu0
    %v876 = vadd.f32 %v835, %v875
    %v877 = vpop.f32.mrf.mxu0
    %v878 = vadd.f32 %v837, %v877
    %v879 = vpop.f32.mrf.mxu0
    %v880 = vpop.f32.mrf.mxu0
    %881 = vdwg.mxu0
    %v882 = vmax.f32 %v876, 0.0
    %v883 = vmax.f32 %v878, 0.0
    %v884 = vpack.c.bf16 %v882, %v882
    %v885 = vpack.c.bf16 %v883, %v883
    %v886 = vld [vmem:[#allocation7] sm:$0xf]
    %v887 = vld [vmem:[#allocation7 + $0x4] sm:$0xf]
    %v888 = vld [vmem:[#allocation7 + $0x8] sm:$0xf]
    %v889 = vld [vmem:[#allocation7 + $0xc] sm:$0xf]
    %v890 = vld [vmem:[#allocation7 + $0x10] sm:$0xf]
    %v891 = vld [vmem:[#allocation7 + $0x14] sm:$0xf]
    %v892 = vld [vmem:[#allocation7 + $0x18] sm:$0xf]
    %v893 = vld [vmem:[#allocation7 + $0x1c] sm:$0xf]
    %v894 = vld [vmem:[#allocation7 + $0x20] sm:$0xf]
    %v895 = vld [vmem:[#allocation7 + $0x24] sm:$0xf]
    %v896 = vld [vmem:[#allocation7 + $0x28] sm:$0xf]
    %v897 = vld [vmem:[#allocation7 + $0x2c] sm:$0xf]
    %v898 = vld [vmem:[#allocation7 + $0x30] sm:$0xf]
    %v899 = vld [vmem:[#allocation7 + $0x34] sm:$0xf]
    %v900 = vld [vmem:[#allocation7 + $0x38] sm:$0xf]
    %v901 = vld [vmem:[#allocation7 + $0x3c] sm:$0xf]
    %v902 = vld [vmem:[#allocation7 + $0x40] sm:$0xf]
    %v903 = vld [vmem:[#allocation7 + $0x44] sm:$0xf]
    %v904 = vld [vmem:[#allocation7 + $0x48] sm:$0xf]
    %v905 = vld [vmem:[#allocation7 + $0x4c] sm:$0xf]
    %v906 = vld [vmem:[#allocation7 + $0x50] sm:$0xf]
    %v907 = vld [vmem:[#allocation7 + $0x54] sm:$0xf]
    %v908 = vld [vmem:[#allocation7 + $0x58] sm:$0xf]
    %v909 = vld [vmem:[#allocation7 + $0x5c] sm:$0xf]
    %v910 = vld [vmem:[#allocation7 + $0x60] sm:$0xf]
    %v911 = vld [vmem:[#allocation7 + $0x64] sm:$0xf]
    %v912 = vld [vmem:[#allocation7 + $0x68] sm:$0xf]
    %v913 = vld [vmem:[#allocation7 + $0x6c] sm:$0xf]
    %v914 = vld [vmem:[#allocation7 + $0x70] sm:$0xf]
    %v915 = vld [vmem:[#allocation7 + $0x74] sm:$0xf]
    %v916 = vld [vmem:[#allocation7 + $0x78] sm:$0xf]
    %v917 = vld [vmem:[#allocation7 + $0x7c] sm:$0xf]
    %v918 = vld [vmem:[%s4] sm:$0x1]
    %v920 = vlaneseq
    %v921 = vshrl.u32 %v920, 7
    %v922 = vsub.s32 0, %v921
    %v923 = vrot.slane %v918, %v922
    %v957 = vunpack.c.l.b16 %v886
    %v958 = vunpack.c.l.b16 %v887
    %v959 = vunpack.c.l.b16 %v888
    %v960 = vunpack.c.l.b16 %v889
    %v961 = vunpack.c.l.b16 %v890
    %v962 = vunpack.c.l.b16 %v891
    %v963 = vunpack.c.l.b16 %v892
    %v964 = vunpack.c.l.b16 %v893
    %v965 = vunpack.c.l.b16 %v894
    %v966 = vunpack.c.l.b16 %v895
    %v967 = vunpack.c.l.b16 %v896
    %v968 = vunpack.c.l.b16 %v897
    %v969 = vunpack.c.l.b16 %v898
    %v970 = vunpack.c.l.b16 %v899
    %v971 = vunpack.c.l.b16 %v900
    %v972 = vunpack.c.l.b16 %v901
    %v973 = vunpack.c.l.b16 %v902
    %v974 = vunpack.c.l.b16 %v903
    %v975 = vunpack.c.l.b16 %v904
    %v976 = vunpack.c.l.b16 %v905
    %v977 = vunpack.c.l.b16 %v906
    %v978 = vunpack.c.l.b16 %v907
    %v979 = vunpack.c.l.b16 %v908
    %v980 = vunpack.c.l.b16 %v909
    %v981 = vunpack.c.l.b16 %v910
    %v982 = vunpack.c.l.b16 %v911
    %v983 = vunpack.c.l.b16 %v912
    %v984 = vunpack.c.l.b16 %v913
    %v985 = vunpack.c.l.b16 %v914
    %v986 = vunpack.c.l.b16 %v915
    %v987 = vunpack.c.l.b16 %v916
    %v988 = vunpack.c.l.b16 %v917
    %v989 = vpack.c.b16 %v958, %v957
    %v990 = vpack.c.b16 %v960, %v959
    %v991 = vpack.c.b16 %v962, %v961
    %v992 = vpack.c.b16 %v964, %v963
    %v993 = vpack.c.b16 %v966, %v965
    %v994 = vpack.c.b16 %v968, %v967
    %v995 = vpack.c.b16 %v970, %v969
    %v996 = vpack.c.b16 %v972, %v971
    %v997 = vpack.c.b16 %v974, %v973
    %v998 = vpack.c.b16 %v976, %v975
    %v999 = vpack.c.b16 %v978, %v977
    %v1000 = vpack.c.b16 %v980, %v979
    %v1001 = vpack.c.b16 %v982, %v981
    %v1002 = vpack.c.b16 %v984, %v983
    %v1003 = vpack.c.b16 %v986, %v985
    %v1004 = vpack.c.b16 %v988, %v987
    %1021 = vmatprep.subr.bf16.mxu0 0
    %1022 = vmatpush1.bf16.msra.mxu0 %v996
    %1023 = vmatprep.subr.bf16.mxu0 0
    %1024 = vmatpush1.bf16.msra.mxu0 %v995
    %1025 = vmatprep.subr.bf16.mxu0 0
    %1026 = vmatpush1.bf16.msra.mxu0 %v994
    %1027 = vmatprep.subr.bf16.mxu0 0
    %1028 = vmatpush1.bf16.msra.mxu0 %v993
    %1029 = vmatprep.subr.bf16.mxu0 0
    %1030 = vmatpush1.bf16.msra.mxu0 %v992
    %1031 = vmatprep.subr.bf16.mxu0 0
    %1032 = vmatpush1.bf16.msra.mxu0 %v991
    %1033 = vmatprep.subr.bf16.mxu0 0
    %1034 = vmatpush1.bf16.msra.mxu0 %v990
    %1035 = vmatprep.subr.bf16.mxu0 0
    %1036 = vmatpush1.bf16.msra.mxu0 %v989
    %1037 = vmatprep.subr.bf16.mxu0 0
    %1038 = vmatpush2.bf16.msra.mxu0 %v1004
    %1039 = vmatprep.subr.bf16.mxu0 0
    %1040 = vmatpush2.bf16.msra.mxu0 %v1003
    %1041 = vmatprep.subr.bf16.mxu0 0
    %1042 = vmatpush2.bf16.msra.mxu0 %v1002
    %1043 = vmatprep.subr.bf16.mxu0 0
    %1044 = vmatpush2.bf16.msra.mxu0 %v1001
    %1045 = vmatprep.subr.bf16.mxu0 0
    %1046 = vmatpush2.bf16.msra.mxu0 %v1000
    %1047 = vmatprep.subr.bf16.mxu0 0
    %1048 = vmatpush2.bf16.msra.mxu0 %v999
    %1049 = vmatprep.subr.bf16.mxu0 0
    %1050 = vmatpush2.bf16.msra.mxu0 %v998
    %1051 = vmatprep.subr.bf16.mxu0 0
    %1052 = vmatpush2.bf16.msra.mxu0 %v997
    %1053 = vmatprep.mubr.bf16.mxu0 %v885
    %1054 = vmatmul.mubr.bf16.gmra.mxu0 %v884
    %v1055 = vpop.f32.mrf.mxu0
    %v1056 = vadd.f32 %v923, %v1055
    %v1057 = vpop.f32.mrf.mxu0
    %v1058 = vpop.f32.mrf.mxu0
    %v1059 = vpop.f32.mrf.mxu0
    %1060 = vdwg.mxu0
    %v1061 = vmax.f32 %v1056, 0.0
    %v1062 = vpack.c.bf16 %v1061, %v1061
    %v1063 = vld [vmem:[#allocation8] sm:$0xf]
    %v1064 = vld [vmem:[#allocation8 + $0x4] sm:$0xf]
    %v1065 = vld [vmem:[#allocation8 + $0x8] sm:$0xf]
    %v1066 = vld [vmem:[#allocation8 + $0xc] sm:$0xf]
    %v1067 = vld [vmem:[#allocation8 + $0x10] sm:$0xf]
    %v1068 = vld [vmem:[#allocation8 + $0x14] sm:$0xf]
    %v1069 = vld [vmem:[#allocation8 + $0x18] sm:$0xf]
    %v1070 = vld [vmem:[#allocation8 + $0x1c] sm:$0xf]
    %v1071 = vld [vmem:[#allocation8 + $0x20] sm:$0xf]
    %v1072 = vld [vmem:[#allocation8 + $0x24] sm:$0xf]
    %v1073 = vld [vmem:[#allocation8 + $0x28] sm:$0xf]
    %v1074 = vld [vmem:[#allocation8 + $0x2c] sm:$0xf]
    %v1075 = vld [vmem:[#allocation8 + $0x30] sm:$0xf]
    %v1076 = vld [vmem:[#allocation8 + $0x34] sm:$0xf]
    %v1077 = vld [vmem:[#allocation8 + $0x38] sm:$0xf]
    %v1078 = vld [vmem:[#allocation8 + $0x3c] sm:$0xf]
    %v1079 = vld [vmem:[%s6] sm:$0x1]
    %v1081 = vlaneseq
    %v1082 = vshrl.u32 %v1081, 7
    %v1083 = vsub.s32 0, %v1082
    %v1084 = vrot.slane %v1079, %v1083
    %v1102 = vunpack.c.l.b16 %v1063
    %v1103 = vunpack.c.l.b16 %v1064
    %v1104 = vunpack.c.l.b16 %v1065
    %v1105 = vunpack.c.l.b16 %v1066
    %v1106 = vunpack.c.l.b16 %v1067
    %v1107 = vunpack.c.l.b16 %v1068
    %v1108 = vunpack.c.l.b16 %v1069
    %v1109 = vunpack.c.l.b16 %v1070
    %v1110 = vunpack.c.l.b16 %v1071
    %v1111 = vunpack.c.l.b16 %v1072
    %v1112 = vunpack.c.l.b16 %v1073
    %v1113 = vunpack.c.l.b16 %v1074
    %v1114 = vunpack.c.l.b16 %v1075
    %v1115 = vunpack.c.l.b16 %v1076
    %v1116 = vunpack.c.l.b16 %v1077
    %v1117 = vunpack.c.l.b16 %v1078
    %v1118 = vpack.c.b16 %v1103, %v1102
    %v1119 = vpack.c.b16 %v1105, %v1104
    %v1120 = vpack.c.b16 %v1107, %v1106
    %v1121 = vpack.c.b16 %v1109, %v1108
    %v1122 = vpack.c.b16 %v1111, %v1110
    %v1123 = vpack.c.b16 %v1113, %v1112
    %v1124 = vpack.c.b16 %v1115, %v1114
    %v1125 = vpack.c.b16 %v1117, %v1116
    %1134 = vmatprep.subr.bf16.mxu0 0
    %1135 = vmatpush1.bf16.msra.mxu0 %v1125
    %1136 = vmatprep.subr.bf16.mxu0 0
    %1137 = vmatpush1.bf16.msra.mxu0 %v1124
    %1138 = vmatprep.subr.bf16.mxu0 0
    %1139 = vmatpush1.bf16.msra.mxu0 %v1123
    %1140 = vmatprep.subr.bf16.mxu0 0
    %1141 = vmatpush1.bf16.msra.mxu0 %v1122
    %1142 = vmatprep.subr.bf16.mxu0 0
    %1143 = vmatpush1.bf16.msra.mxu0 %v1121
    %1144 = vmatprep.subr.bf16.mxu0 0
    %1145 = vmatpush1.bf16.msra.mxu0 %v1120
    %1146 = vmatprep.subr.bf16.mxu0 0
    %1147 = vmatpush1.bf16.msra.mxu0 %v1119
    %1148 = vmatprep.subr.bf16.mxu0 0
    %1149 = vmatpush1.bf16.msra.mxu0 %v1118
    %1150 = vmatprep.subr.bf16.mxu0 0
    %1151 = vmatpush2.bf16.msra.mxu0 0
    %1152 = vmatprep.subr.bf16.mxu0 0
    %1153 = vmatpush2.bf16.msra.mxu0 0
    %1154 = vmatprep.subr.bf16.mxu0 0
    %1155 = vmatpush2.bf16.msra.mxu0 0
    %1156 = vmatprep.subr.bf16.mxu0 0
    %1157 = vmatpush2.bf16.msra.mxu0 0
    %1158 = vmatprep.subr.bf16.mxu0 0
    %1159 = vmatpush2.bf16.msra.mxu0 0
    %1160 = vmatprep.subr.bf16.mxu0 0
    %1161 = vmatpush2.bf16.msra.mxu0 0
    %1162 = vmatprep.subr.bf16.mxu0 0
    %1163 = vmatpush2.bf16.msra.mxu0 0
    %1164 = vmatprep.subr.bf16.mxu0 0
    %1165 = vmatpush2.bf16.msra.mxu0 0
    %1166 = vmatprep.mubr.bf16.mxu0 0
    %1167 = vmatmul.mubr.bf16.gmra.mxu0 %v1062
    %v1168 = vpop.f32.mrf.mxu0
    %v1169 = vadd.f32 %v1084, %v1168
    %v1170 = vpop.f32.mrf.mxu0
    %v1171 = vpop.f32.mrf.mxu0
    %v1172 = vpop.f32.mrf.mxu0
    %1173 = vdwg.mxu0
    %v1174 = vmax.f32 %v1169, 0.0
    %v1175 = vpack.c.bf16 %v1174, %v1174
    %v1176 = vld [vmem:[#allocation10] sm:$0xf]
    %v1177 = vld [vmem:[#allocation10 + $0x4] sm:$0xf]
    %v1178 = vld [vmem:[#allocation10 + $0x8] sm:$0xf]
    %v1179 = vld [vmem:[#allocation10 + $0xc] sm:$0xf]
    %v1180 = vld [vmem:[#allocation10 + $0x10] sm:$0xf]
    %v1181 = vld [vmem:[#allocation10 + $0x14] sm:$0xf]
    %v1182 = vld [vmem:[#allocation10 + $0x18] sm:$0xf]
    %v1183 = vld [vmem:[#allocation10 + $0x1c] sm:$0xf]
    %v1184 = vld [vmem:[#allocation10 + $0x20] sm:$0xf]
    %v1185 = vld [vmem:[#allocation10 + $0x24] sm:$0xf]
    %v1186 = vld [vmem:[#allocation10 + $0x28] sm:$0xf]
    %v1187 = vld [vmem:[#allocation10 + $0x2c] sm:$0xf]
    %v1188 = vld [vmem:[#allocation10 + $0x30] sm:$0xf]
    %v1189 = vld [vmem:[#allocation10 + $0x34] sm:$0xf]
    %v1190 = vld [vmem:[#allocation10 + $0x38] sm:$0xf]
    %v1191 = vld [vmem:[#allocation10 + $0x3c] sm:$0xf]
    %v1192 = vld [vmem:[%s8] sm:$0x1]
    %v1194 = vlaneseq
    %v1195 = vshrl.u32 %v1194, 7
    %v1196 = vsub.s32 0, %v1195
    %v1197 = vrot.slane %v1192, %v1196
    %v1215 = vunpack.c.l.b16 %v1176
    %v1216 = vunpack.c.l.b16 %v1177
    %v1217 = vunpack.c.l.b16 %v1178
    %v1218 = vunpack.c.l.b16 %v1179
    %v1219 = vunpack.c.l.b16 %v1180
    %v1220 = vunpack.c.l.b16 %v1181
    %v1221 = vunpack.c.l.b16 %v1182
    %v1222 = vunpack.c.l.b16 %v1183
    %v1223 = vunpack.c.l.b16 %v1184
    %v1224 = vunpack.c.l.b16 %v1185
    %v1225 = vunpack.c.l.b16 %v1186
    %v1226 = vunpack.c.l.b16 %v1187
    %v1227 = vunpack.c.l.b16 %v1188
    %v1228 = vunpack.c.l.b16 %v1189
    %v1229 = vunpack.c.l.b16 %v1190
    %v1230 = vunpack.c.l.b16 %v1191
    %v1231 = vpack.c.b16 %v1216, %v1215
    %v1232 = vpack.c.b16 %v1218, %v1217
    %v1233 = vpack.c.b16 %v1220, %v1219
    %v1234 = vpack.c.b16 %v1222, %v1221
    %v1235 = vpack.c.b16 %v1224, %v1223
    %v1236 = vpack.c.b16 %v1226, %v1225
    %v1237 = vpack.c.b16 %v1228, %v1227
    %v1238 = vpack.c.b16 %v1230, %v1229
    %1247 = vmatprep.subr.bf16.mxu0 0
    %1248 = vmatpush1.bf16.msra.mxu0 %v1238
    %1249 = vmatprep.subr.bf16.mxu0 0
    %1250 = vmatpush1.bf16.msra.mxu0 %v1237
    %1251 = vmatprep.subr.bf16.mxu0 0
    %1252 = vmatpush1.bf16.msra.mxu0 %v1236
    %1253 = vmatprep.subr.bf16.mxu0 0
    %1254 = vmatpush1.bf16.msra.mxu0 %v1235
    %1255 = vmatprep.subr.bf16.mxu0 0
    %1256 = vmatpush1.bf16.msra.mxu0 %v1234
    %1257 = vmatprep.subr.bf16.mxu0 0
    %1258 = vmatpush1.bf16.msra.mxu0 %v1233
    %1259 = vmatprep.subr.bf16.mxu0 0
    %1260 = vmatpush1.bf16.msra.mxu0 %v1232
    %1261 = vmatprep.subr.bf16.mxu0 0
    %1262 = vmatpush1.bf16.msra.mxu0 %v1231
    %1263 = vmatprep.subr.bf16.mxu0 0
    %1264 = vmatpush2.bf16.msra.mxu0 0
    %1265 = vmatprep.subr.bf16.mxu0 0
    %1266 = vmatpush2.bf16.msra.mxu0 0
    %1267 = vmatprep.subr.bf16.mxu0 0
    %1268 = vmatpush2.bf16.msra.mxu0 0
    %1269 = vmatprep.subr.bf16.mxu0 0
    %1270 = vmatpush2.bf16.msra.mxu0 0
    %1271 = vmatprep.subr.bf16.mxu0 0
    %1272 = vmatpush2.bf16.msra.mxu0 0
    %1273 = vmatprep.subr.bf16.mxu0 0
    %1274 = vmatpush2.bf16.msra.mxu0 0
    %1275 = vmatprep.subr.bf16.mxu0 0
    %1276 = vmatpush2.bf16.msra.mxu0 0
    %1277 = vmatprep.subr.bf16.mxu0 0
    %1278 = vmatpush2.bf16.msra.mxu0 0
    %1279 = vmatprep.mubr.bf16.mxu0 0
    %1280 = vmatmul.mubr.bf16.gmra.mxu0 %v1175
    %v1281 = vpop.f32.mrf.mxu0
    %v1282 = vadd.f32 %v1197, %v1281
    %v1283 = vpop.f32.mrf.mxu0
    %v1284 = vpop.f32.mrf.mxu0
    %v1285 = vpop.f32.mrf.mxu0
    %1286 = vdwg.mxu0
    %1287 = vmax.xlane.f32.xlu0 %v1282
    %v1288 = vpop.xlane.xlu0 %1287
    %v1289 = vsub.f32 %v1282, %v1288
    %v1290 = vmul.f32 %v1289, 1.442695
    %v1291 = vpow.pop %v1290
    %1292 = vadd.xlane.f32.xlu0 %v1291
    %v1293 = vpop.xlane.xlu0 %1292
    %v1294 = vrcp.pop %v1293
    %v1295 = vmul.f32 %v1291, %v1294
    %v1296 = vpack.c.bf16 %v1295, %v1295
    %1297 = vst [vmem:[#allocation11] sm:$0xf] %v1296
    // Predicated region
    $region58: #{tpu_custom_call.1} parent=1 // pred_check
      _
    $region59: #{tpu_custom_call.1} parent=1 // pred_check_branch
      %1299 = sbr.rel (0) target = $region61
    $region60: #{tpu_custom_call.1} parent=1 // pred_region
      %s1301 = ssub.s32 64, 64
      %1302 = vsyncadd [#allocation4], %s1301
      %s1304 = sshll.u32 [#allocation11], 4
      %s1305 = int_to_ptr.vmem [resolvable:$true] %s1304
      %1307 = dma.vmem_to_hbm [thread:$0]  %s1305, 64, %s9, [#allocation4]
    $region61: #{tpu_custom_call.1} parent=1 // pred_fallthru
      _
    // Predicated region
    $region62: #{tpu_custom_call.1} parent=1 // pred_check
      _
    $region63: #{tpu_custom_call.1} parent=1 // pred_check_branch
      %1309 = sbr.rel (0) target = $region65
    $region64: #{tpu_custom_call.1} parent=1 // pred_region
      %1310 = dma.done [#allocation4], 64
    $region65: #{tpu_custom_call.1} parent=1 // pred_fallthru
      _
    %1311 = vsyncpa [#allocation3], 1
    %1312 = vsyncpa [#allocation6], 1
    %1313 = vsyncpa [#allocation9], 1
    %1314 = vsyncpa [#allocation4], 1

</llo_original>
